<compile_context>
chip_gen: v7x
topology: tpu7x:2x2x1
jax: 0.10.0
libtpu: 0.0.40
codegen_flags: <defaults>
</compile_context>

<pallas_src>
import jax
import jax.numpy as jnp
from jax.experimental import pallas as pl
from jax.experimental.pallas import tpu as pltpu


def _round_up(x, m):
    return ((x + m - 1) // m) * m


def _sigmoid(x):
    # exact 1/(1+exp(-x)); shared by kernel and reference so they match.
    # (production variant: pl.reciprocal(1 + exp(-x), approx=True) to keep the
    #  divide off the hot VALU path - tanh/exp already saturate the EUP slot)
    return 1.0 / (1.0 + jnp.exp(-x))


# ----------------------------------------------------------------------------
# Stage 1: embedding lookup + fused forward/backward input-to-hidden projection
# ----------------------------------------------------------------------------
def _embed_proj_kernel(tok_ref, table_ref, w_ref, b_ref, out_ref):
    """tok_ref:   (TM, 1)    int32  token ids for this tile of flattened (B*S)
       table_ref: (V, H)     float  embedding table (padding_idx row is zero)
       w_ref:     (H, 8*Hh)  float  [W_ih_fwd^T | W_ih_bwd^T]
       b_ref:     (1, 8*Hh)  f32    [(b_ih+b_hh)_fwd | (b_ih+b_hh)_bwd]
       out_ref:   (TM, 8*Hh) f32
    """
    tok = tok_ref[...]                                             # (TM, 1)
    V = table_ref.shape[0]
    vocab = jax.lax.broadcasted_iota(jnp.int32, (1, V), 1)         # (1, V)
    onehot = (tok == vocab).astype(table_ref.dtype)                # (TM, V)
    # TODO(synk): for large vocabularies replace the one-hot matmul with a
    # scalar-prefetch row gather (pl.Element BlockSpec) or a manual DMA gather.
    emb = jnp.dot(onehot, table_ref[...],
                  preferred_element_type=jnp.float32)              # (TM, H)
    proj = jnp.dot(emb.astype(w_ref.dtype), w_ref[...],
                   preferred_element_type=jnp.float32) + b_ref[...]
    out_ref[...] = proj.astype(out_ref.dtype)


# ----------------------------------------------------------------------------
# Stage 2: sequential bidirectional LSTM recurrence (one direction / grid step)
# ----------------------------------------------------------------------------
def _bilstm_kernel(lens_ref, x_ref, whh_ref, out_ref, hn_ref, cn_ref):
    """lens_ref: (B, 1)       int32
       x_ref:    (S, B, 4*Hh) f32    precomputed x @ W_ih^T + b, this direction
       whh_ref:  (Hh, 4*Hh)   float  W_hh^T, this direction
       out_ref:  (S, B, Hh)   f32    hidden states (0 at padded positions)
       hn_ref:   (B, Hh)      f32    final hidden state
       cn_ref:   (B, Hh)      f32    final cell state
    """
    d = pl.program_id(0)          # 0 = forward direction, 1 = backward
    S, B, _ = x_ref.shape
    Hh = hn_ref.shape[-1]

    whh = whh_ref[...]
    lens = lens_ref[...]                                           # (B, 1)

    def step(t, carry):
        h, c = carry
        # forward walks t = 0..S-1, backward walks t = S-1..0
        time = t + d * (S - 1 - 2 * t)
        x_t = x_ref[time]                                          # (B, 4*Hh)
        gates = x_t + jnp.dot(h.astype(whh.dtype), whh,
                              preferred_element_type=jnp.float32)  # (B, 4*Hh)
        i_g = _sigmoid(gates[:, 0 * Hh:1 * Hh])
        f_g = _sigmoid(gates[:, 1 * Hh:2 * Hh])
        g_g = jnp.tanh(gates[:, 2 * Hh:3 * Hh])
        o_g = _sigmoid(gates[:, 3 * Hh:4 * Hh])
        c_new = f_g * c + i_g * g_g
        h_new = o_g * jnp.tanh(c_new)
        valid = time < lens                                        # (B, 1)
        # packed-sequence semantics: state advances only on valid steps,
        # padded output positions are zero (pad_packed_sequence default).
        h = jnp.where(valid, h_new, h)
        c = jnp.where(valid, c_new, c)
        out_ref[time] = jnp.where(valid, h_new, 0.0).astype(out_ref.dtype)
        return h, c

    h0 = jnp.zeros((B, Hh), jnp.float32)
    c0 = jnp.zeros((B, Hh), jnp.float32)
    h_fin, c_fin = jax.lax.fori_loop(0, S, step, (h0, c0))
    hn_ref[...] = h_fin.astype(hn_ref.dtype)
    cn_ref[...] = c_fin.astype(cn_ref.dtype)


# ----------------------------------------------------------------------------
# Wrapper
# ----------------------------------------------------------------------------
def encoder_forward_pallas(src, lengths, params, mxu_dtype=jnp.float32):
    """src: (B, S) int32 token ids, lengths: (B,) int32 (>= 1).
    Returns enc_output (B, S, H), (h_n, c_n) each (2, B, H//2).
    Set mxu_dtype=jnp.bfloat16 on v6e/v7x for ~2x MXU throughput."""
    (table, w_ih_f, w_hh_f, b_ih_f, b_hh_f,
     w_ih_b, w_hh_b, b_ih_b, b_hh_b) = params
    B, S = src.shape
    V, H = table.shape
    Hh = H // 2
    G = 4 * Hh

    # ---------------- Stage 1: batch-flattened embed + input projections ----
    w_comb = jnp.concatenate([w_ih_f.T, w_ih_b.T], axis=1).astype(mxu_dtype)  # (H, 2G)
    b_comb = jnp.concatenate([b_ih_f + b_hh_f,
                              b_ih_b + b_hh_b]).reshape(1, 2 * G).astype(jnp.float32)
    table_k = table.astype(mxu_dtype)

    BS = B * S
    TM = min(512, _round_up(BS, 8))
    BS_pad = _round_up(BS, TM)
    tok = src.reshape(BS, 1).astype(jnp.int32)
    tok = jnp.pad(tok, ((0, BS_pad - BS), (0, 0)))

    xproj = pl.pallas_call(
        _embed_proj_kernel,
        grid=(BS_pad // TM,),
        in_specs=[
            pl.BlockSpec((TM, 1), lambda i: (i, 0)),        # token ids
            pl.BlockSpec((V, H), lambda i: (0, 0)),         # embedding table
            pl.BlockSpec((H, 2 * G), lambda i: (0, 0)),     # fused W_ih^T
            pl.BlockSpec((1, 2 * G), lambda i: (0, 0)),     # fused biases
        ],
        out_specs=pl.BlockSpec((TM, 2 * G), lambda i: (i, 0)),
        out_shape=jax.ShapeDtypeStruct((BS_pad, 2 * G), jnp.float32),
        compiler_params=pltpu.CompilerParams(
            dimension_semantics=("parallel",)),
    )(tok, table_k, w_comb, b_comb)

    xproj = xproj[:BS]
    x_f = xproj[:, :G].reshape(B, S, G)
    x_b = xproj[:, G:].reshape(B, S, G)
    x_dir = jnp.stack([x_f, x_b], axis=0).transpose(0, 2, 1, 3)   # (2, S, B, G)

    # ---------------- Stage 2: recurrence, one direction per grid step ------
    whh_T = jnp.stack([w_hh_f.T, w_hh_b.T], axis=0).astype(mxu_dtype)  # (2, Hh, G)
    lens2d = lengths.reshape(B, 1).astype(jnp.int32)

    out_dir, h_n, c_n = pl.pallas_call(
        _bilstm_kernel,
        grid=(2,),
        in_specs=[
            pl.BlockSpec((B, 1), lambda d: (0, 0)),                 # lengths
            pl.BlockSpec((None, S, B, G), lambda d: (d, 0, 0, 0)),  # x proj
            pl.BlockSpec((None, Hh, G), lambda d: (d, 0, 0)),       # W_hh^T
        ],
        out_specs=[
            pl.BlockSpec((None, S, B, Hh), lambda d: (d, 0, 0, 0)),  # per-t h
            pl.BlockSpec((None, B, Hh), lambda d: (d, 0, 0)),        # h_n
            pl.BlockSpec((None, B, Hh), lambda d: (d, 0, 0)),        # c_n
        ],
        out_shape=(
            jax.ShapeDtypeStruct((2, S, B, Hh), jnp.float32),
            jax.ShapeDtypeStruct((2, B, Hh), jnp.float32),
            jax.ShapeDtypeStruct((2, B, Hh), jnp.float32),
        ),
        compiler_params=pltpu.CompilerParams(
            dimension_semantics=("parallel",)),   # 2 directions -> 2 TCs (v7x)
    )(lens2d, x_dir.astype(jnp.float32), whh_T)

    enc_output = jnp.concatenate(
        [jnp.transpose(out_dir[0], (1, 0, 2)),
         jnp.transpose(out_dir[1], (1, 0, 2))], axis=-1)            # (B, S, H)
    # TODO(synk): dropout after the embedding / LSTM output is identity at
    # inference; training-mode dropout would use pltpu.prng_seed +
    # pltpu.stateful_bernoulli inside the kernels.
    return enc_output, (h_n, c_n)


# ----------------------------------------------------------------------------
# Pure-JAX reference (same packed-BiLSTM semantics as the PyTorch Encoder)
# ----------------------------------------------------------------------------
def encoder_forward_ref(src, lengths, params):
    (table, w_ih_f, w_hh_f, b_ih_f, b_hh_f,
     w_ih_b, w_hh_b, b_ih_b, b_hh_b) = params
    B, S = src.shape
    H = table.shape[1]
    Hh = H // 2
    emb = table[src]                                               # (B, S, H)

    def run(w_ih, w_hh, b_ih, b_hh, reverse):
        h = jnp.zeros((B, Hh), jnp.float32)
        c = jnp.zeros((B, Hh), jnp.float32)
        outs = [None] * S
        order = range(S - 1, -1, -1) if reverse else range(S)
        for t in order:
            gates = emb[:, t, :] @ w_ih.T + b_ih + h @ w_hh.T + b_hh
            i_g = _sigmoid(gates[:, 0 * Hh:1 * Hh])
            f_g = _sigmoid(gates[:, 1 * Hh:2 * Hh])
            g_g = jnp.tanh(gates[:, 2 * Hh:3 * Hh])
            o_g = _sigmoid(gates[:, 3 * Hh:4 * Hh])
            c_new = f_g * c + i_g * g_g
            h_new = o_g * jnp.tanh(c_new)
            valid = (t < lengths)[:, None]
            h = jnp.where(valid, h_new, h)
            c = jnp.where(valid, c_new, c)
            outs[t] = jnp.where(valid, h_new, 0.0)
        return jnp.stack(outs, axis=1), h, c

    of, hf, cf = run(w_ih_f, w_hh_f, b_ih_f, b_hh_f, reverse=False)
    ob, hb, cb = run(w_ih_b, w_hh_b, b_ih_b, b_hh_b, reverse=True)
    enc_output = jnp.concatenate([of, ob], axis=-1)
    h_n = jnp.stack([hf, hb], axis=0)
    c_n = jnp.stack([cf, cb], axis=0)
    return enc_output, (h_n, c_n)


def init_encoder_params(key, src_vocab_size, hidden_size, padding_idx):
    Hh = hidden_size // 2
    ks = jax.random.split(key, 9)
    sc = 0.1

    def lin(k, shape):
        return sc * jax.random.normal(k, shape, jnp.float32)

    table = lin(ks[0], (src_vocab_size, hidden_size))
    table = table.at[padding_idx].set(0.0)                 # nn.Embedding padding_idx
    w_ih_f = lin(ks[1], (4 * Hh, hidden_size))
    w_hh_f = lin(ks[2], (4 * Hh, Hh))
    b_ih_f = lin(ks[3], (4 * Hh,))
    b_hh_f = lin(ks[4], (4 * Hh,))
    w_ih_b = lin(ks[5], (4 * Hh, hidden_size))
    w_hh_b = lin(ks[6], (4 * Hh, Hh))
    b_ih_b = lin(ks[7], (4 * Hh,))
    b_hh_b = lin(ks[8], (4 * Hh,))
    return (table, w_ih_f, w_hh_f, b_ih_f, b_hh_f,
            w_ih_b, w_hh_b, b_ih_b, b_hh_b)


if __name__ == "__main__":
    B, S, H, V = 2, 8, 32, 50           # batch, seq, hidden_size, src_vocab_size
    padding_idx = 0
    key = jax.random.PRNGKey(0)
    k_tok, k_par = jax.random.split(key)

    lengths = jnp.array([S, 5], dtype=jnp.int32)
    src = jax.random.randint(k_tok, (B, S), 1, V, dtype=jnp.int32)
    pos = jnp.arange(S)[None, :]
    src = jnp.where(pos < lengths[:, None], src, padding_idx)

    params = init_encoder_params(k_par, V, H, padding_idx)

    enc_out, (h_n, c_n) = encoder_forward_pallas(src, lengths, params)
    jax.block_until_ready((enc_out, h_n, c_n))

    ref_out, (ref_h, ref_c) = encoder_forward_ref(src, lengths, params)

    assert enc_out.shape == (B, S, H)
    assert h_n.shape == (2, B, H // 2) and c_n.shape == (2, B, H // 2)
    assert jnp.allclose(enc_out, ref_out, atol=1e-4, rtol=1e-4)
    assert jnp.allclose(h_n, ref_h, atol=1e-4, rtol=1e-4)
    assert jnp.allclose(c_n, ref_c, atol=1e-4, rtol=1e-4)

    print("KERNEL_OK")
</pallas_src>

<mosaic_0001>
module attributes {stable_mosaic.version = 11 : i64} {
  func.func @_embed_proj_kernel(%arg0: i32, %arg1: memref<16x1xi32, #tpu.memory_space<vmem>>, %arg2: memref<50x32xf32, #tpu.memory_space<vmem>>, %arg3: memref<32x128xf32, #tpu.memory_space<vmem>>, %arg4: memref<1x128xf32, #tpu.memory_space<vmem>>, %arg5: memref<16x128xf32, #tpu.memory_space<vmem>>) attributes {dimension_semantics = [#tpu.dimension_semantics<parallel>], iteration_bounds = array<i64: 1>, scalar_prefetch = 0 : i64, scratch_operands = 0 : i64, tpu.core_type = #tpu.core_type<tc>, window_params = [{transform_indices = @transform_0, window_bounds = array<i64: 16, 1>}, {pipeline_mode = #tpu.pipeline_mode<synchronous>, transform_indices = @transform_1, window_bounds = array<i64: 50, 32>}, {pipeline_mode = #tpu.pipeline_mode<synchronous>, transform_indices = @transform_2, window_bounds = array<i64: 32, 128>}, {pipeline_mode = #tpu.pipeline_mode<synchronous>, transform_indices = @transform_3, window_bounds = array<i64: 1, 128>}, {transform_indices = @transform_4, window_bounds = array<i64: 16, 128>}]} {
    %c0 = arith.constant 0 : index
    %c0_0 = arith.constant 0 : index
    %0 = vector.load %arg1[%c0, %c0_0] : memref<16x1xi32, #tpu.memory_space<vmem>>, vector<16x1xi32>
    %1 = tpu.iota {dimensions = array<i32: 1>} : vector<1x50xi32>
    %2 = vector.broadcast %0 : vector<16x1xi32> to vector<16x50xi32>
    %3 = vector.broadcast %1 : vector<1x50xi32> to vector<16x50xi32>
    %4 = arith.cmpi eq, %2, %3 : vector<16x50xi32>
    %5 = arith.extui %4 : vector<16x50xi1> to vector<16x50xi32>
    %6 = arith.sitofp %5 : vector<16x50xi32> to vector<16x50xf32>
    %c0_1 = arith.constant 0 : index
    %c0_2 = arith.constant 0 : index
    %7 = vector.load %arg2[%c0_1, %c0_2] : memref<50x32xf32, #tpu.memory_space<vmem>>, vector<50x32xf32>
    %cst = arith.constant dense<0.000000e+00> : vector<16x32xf32>
    %8 = tpu.matmul %6, %7, %cst {dimension_numbers = #tpu.dot_dimension_numbers<[1], [0], [0], [1], [0, 0, 1, 1], [], []>} : vector<16x50xf32>, vector<50x32xf32>, vector<16x32xf32> -> vector<16x32xf32>
    %c0_3 = arith.constant 0 : index
    %c0_4 = arith.constant 0 : index
    %9 = vector.load %arg3[%c0_3, %c0_4] : memref<32x128xf32, #tpu.memory_space<vmem>>, vector<32x128xf32>
    %cst_5 = arith.constant dense<0.000000e+00> : vector<16x128xf32>
    %10 = tpu.matmul %8, %9, %cst_5 {dimension_numbers = #tpu.dot_dimension_numbers<[1], [0], [0], [1], [0, 0, 1, 1], [], []>} : vector<16x32xf32>, vector<32x128xf32>, vector<16x128xf32> -> vector<16x128xf32>
    %c0_6 = arith.constant 0 : index
    %c0_7 = arith.constant 0 : index
    %11 = vector.load %arg4[%c0_6, %c0_7] : memref<1x128xf32, #tpu.memory_space<vmem>>, vector<1x128xf32>
    %12 = vector.broadcast %11 : vector<1x128xf32> to vector<16x128xf32>
    %13 = arith.addf %10, %12 : vector<16x128xf32>
    %c0_8 = arith.constant 0 : index
    %c0_9 = arith.constant 0 : index
    %14 = vector.load %arg5[%c0_8, %c0_9] : memref<16x128xf32, #tpu.memory_space<vmem>>, vector<16x128xf32>
    tpu.vector_store %arg5[%c0_8, %c0_9], %13 {strides = array<i32>} : memref<16x128xf32, #tpu.memory_space<vmem>>, vector<16x128xf32>,
    return
  }
  func.func @transform_0(%arg0: i32) -> (i32, i32) {
    %c0_i32 = arith.constant 0 : i32
    %c0_i32_0 = arith.constant 0 : i32
    return %arg0, %c0_i32 : i32, i32
  }
  func.func @transform_1(%arg0: i32) -> (i32, i32) {
    %c0_i32 = arith.constant 0 : i32
    %c0_i32_0 = arith.constant 0 : i32
    %c0_i32_1 = arith.constant 0 : i32
    return %c0_i32, %c0_i32_0 : i32, i32
  }
  func.func @transform_2(%arg0: i32) -> (i32, i32) {
    %c0_i32 = arith.constant 0 : i32
    %c0_i32_0 = arith.constant 0 : i32
    %c0_i32_1 = arith.constant 0 : i32
    return %c0_i32, %c0_i32_0 : i32, i32
  }
  func.func @transform_3(%arg0: i32) -> (i32, i32) {
    %c0_i32 = arith.constant 0 : i32
    %c0_i32_0 = arith.constant 0 : i32
    %c0_i32_1 = arith.constant 0 : i32
    return %c0_i32, %c0_i32_0 : i32, i32
  }
  func.func @transform_4(%arg0: i32) -> (i32, i32) {
    %c0_i32 = arith.constant 0 : i32
    %c0_i32_0 = arith.constant 0 : i32
    return %arg0, %c0_i32 : i32, i32
  }
}

</mosaic_0001>

<llo_original>
// kernel: tpu_custom_call.1
$region0: #{tpu_custom_call.1}
  #allocation0 [shape = 'u32[]', space=smem, size = 0x4, offset = 0x4, fixed_abs, tag = 'smem constant byte address 0x4 - core index']
  #allocation1 [shape = 'u32[144,128]{1,0:T(1,128)}', space=vmem, size = 0x12000, scoped, tag = 'internal scratch']
  %s0 = inlined_call_operand.vmem [shape: s32[16,1], index: 0, kind: input, shape index: {}]
  %s1 = inlined_call_operand.vmem [shape: f32[50,32], index: 1, kind: input, shape index: {}]
  %s2 = inlined_call_operand.vmem [shape: f32[32,128], index: 2, kind: input, shape index: {}]
  %s3 = inlined_call_operand.vmem [shape: f32[1,128], index: 3, kind: input, shape index: {}]
  %s4 = inlined_call_operand.hbm [shape: f32[16,128], index: 4, kind: output, shape index: {}]
  %s5 = sld [smem:[#allocation0]]
  $region26: #{tpu_custom_call.1} parent=0
    _
  %s7 = ssub.s32 1, %s5
  %s8 = scalar_select 0, %s7, %s5
  $region1: #{tpu_custom_call.1} parent=0
    #allocation2 [shape = 'u8[8192]{0}', space=vmem, size = 0x2000, scoped, tag = 'output window, operand 0, single buffered']
    #allocation3 [shape = 's32[1]{0}', space=sflag, size = 0x4, scoped, tag = 'scoped memory for tpu_custom_call.1']
    %9 = vsyncpa [#allocation3], 0
    // Predicated region
    $region2: #{tpu_custom_call.1} parent=1 // pred_check
      _
    $region3: #{tpu_custom_call.1} parent=1 // pred_check_branch
      %11 = sbr.rel (0) target = $region5
    $region4: #{tpu_custom_call.1} parent=1 // pred_region
      _
    $region5: #{tpu_custom_call.1} parent=1 // pred_fallthru
      _
    // Predicated region
    $region6: #{tpu_custom_call.1} parent=1 // pred_check
      _
    $region7: #{tpu_custom_call.1} parent=1 // pred_check_branch
      %13 = sbr.rel (0) target = $region9
    $region8: #{tpu_custom_call.1} parent=1 // pred_region
      _
    $region9: #{tpu_custom_call.1} parent=1 // pred_fallthru
      _
    // Predicated region
    $region10: #{tpu_custom_call.1} parent=1 // pred_check
      _
    $region11: #{tpu_custom_call.1} parent=1 // pred_check_branch
      %15 = sbr.rel (0) target = $region13
    $region12: #{tpu_custom_call.1} parent=1 // pred_region
      _
    $region13: #{tpu_custom_call.1} parent=1 // pred_fallthru
      _
    // Predicated region
    $region14: #{tpu_custom_call.1} parent=1 // pred_check
      _
    $region15: #{tpu_custom_call.1} parent=1 // pred_check_branch
      %17 = sbr.rel (0) target = $region17
    $region16: #{tpu_custom_call.1} parent=1 // pred_region
      _
    $region17: #{tpu_custom_call.1} parent=1 // pred_fallthru
      _
    %v18 = vld [vmem:[%s0] sm:$0xff]
    %v19 = vld [vmem:[%s0 + $0x8] sm:$0xff]
    %v20 = vlaneseq
    %v21 = vand.u32 %v20, 127
    %22 = vset.pattern.permute.xlu0 0
    %23 = vperm.xlu0 %22, %v18
    %v24 = vpop.permute.xlu0 %23
    %25 = vset.pattern.permute.xlu0 0
    %26 = vperm.xlu0 %25, %v19
    %v27 = vpop.permute.xlu0 %26
    %vm28 = vcmp.eq.s32.totalorder %v24, %v21
    %vm29 = vcmp.eq.s32.totalorder %v27, %v21
    %v30 = vsel %vm28, 1, 0
    %v31 = vsel %vm29, 1, 0
    %v32 = vcvt.s32.f32 %v30
    %v33 = vcvt.s32.f32 %v31
    %v34 = vld [vmem:[%s1] sm:$0xff]
    %v35 = vld [vmem:[%s1 + $0x8] sm:$0xff]
    %v36 = vld [vmem:[%s1 + $0x10] sm:$0xff]
    %v37 = vld [vmem:[%s1 + $0x18] sm:$0xff]
    %v38 = vld [vmem:[%s1 + $0x20] sm:$0xff]
    %v39 = vld [vmem:[%s1 + $0x28] sm:$0xff]
    %v40 = vld [vmem:[%s1 + $0x30] sm:$0x3]
    %vm41 = vcmask 408576
    %v43 = vsel %vm41, %v32, 0
    %v46 = vsel %vm41, %v33, 0
    %vm48 = vcmask 1041408
    %v50 = vsel %vm48, %v40, 0
    %52 = vmatprep.subr.mxu0 0.0
    %53 = vmatpush1.msra.mxu0 %v34
    %54 = vmatprep.subr.mxu0 0.0
    %55 = vmatpush1.msra.mxu0 %v35
    %56 = vmatprep.subr.mxu0 0.0
    %57 = vmatpush1.msra.mxu0 %v36
    %58 = vmatprep.subr.mxu0 0.0
    %59 = vmatpush1.msra.mxu0 %v37
    %60 = vmatprep.subr.mxu0 0.0
    %61 = vmatpush1.msra.mxu0 %v38
    %62 = vmatprep.subr.mxu0 0.0
    %63 = vmatpush1.msra.mxu0 %v39
    %64 = vmatprep.subr.mxu0 0.0
    %65 = vmatpush1.msra.mxu0 %v50
    %66 = vmatprep.subr.mxu0 0.0
    %67 = vmatpush1.msra.mxu0 0.0
    %68 = vmatprep.subr.mxu0 0.0
    %69 = vmatpush1.msra.mxu0 0.0
    %70 = vmatprep.subr.mxu0 0.0
    %71 = vmatpush1.msra.mxu0 0.0
    %72 = vmatprep.subr.mxu0 0.0
    %73 = vmatpush1.msra.mxu0 0.0
    %74 = vmatprep.subr.mxu0 0.0
    %75 = vmatpush1.msra.mxu0 0.0
    %76 = vmatprep.subr.mxu0 0.0
    %77 = vmatpush1.msra.mxu0 0.0
    %78 = vmatprep.subr.mxu0 0.0
    %79 = vmatpush1.msra.mxu0 0.0
    %80 = vmatprep.subr.mxu0 0.0
    %81 = vmatpush1.msra.mxu0 0.0
    %82 = vmatprep.subr.mxu0 0.0
    %83 = vmatpush1.msra.mxu0 0.0
    %84 = vmatprep.subr.mxu0 0.0
    %85 = vmatpush1.msra.mxu0 0.0
    %86 = vmatprep.subr.mxu0 0.0
    %87 = vmatpush1.msra.mxu0 0.0
    %88 = vmatprep.subr.mxu0 0.0
    %89 = vmatpush1.msra.mxu0 0.0
    %90 = vmatprep.subr.mxu0 0.0
    %91 = vmatpush1.msra.mxu0 0.0
    %92 = vmatprep.subr.mxu0 0.0
    %93 = vmatpush1.msra.mxu0 0.0
    %94 = vmatprep.subr.mxu0 0.0
    %95 = vmatpush1.msra.mxu0 0.0
    %96 = vmatprep.subr.mxu0 0.0
    %97 = vmatpush1.msra.mxu0 0.0
    %98 = vmatprep.subr.mxu0 0.0
    %99 = vmatpush1.msra.mxu0 0.0
    %100 = vmatprep.subr.mxu0 0.0
    %101 = vmatpush1.msra.mxu0 0.0
    %102 = vmatprep.subr.mxu0 0.0
    %103 = vmatpush1.msra.mxu0 0.0
    %104 = vmatprep.subr.mxu0 0.0
    %105 = vmatpush1.msra.mxu0 0.0
    %106 = vmatprep.subr.mxu0 0.0
    %107 = vmatpush1.msra.mxu0 0.0
    %108 = vmatprep.subr.mxu0 0.0
    %109 = vmatpush1.msra.mxu0 0.0
    %110 = vmatprep.subr.mxu0 0.0
    %111 = vmatpush1.msra.mxu0 0.0
    %112 = vmatprep.subr.mxu0 0.0
    %113 = vmatpush1.msra.mxu0 0.0
    %114 = vmatprep.subr.mxu0 0.0
    %115 = vmatpush1.msra.mxu0 0.0
    %116 = vmatprep.mubr.f32.mxu0 0.0
    %117 = vmatmul.mubr.f32.gmra.mrb[0].mxu0 %v43
    %v118 = vpop.f32.mrb[0].mxu0
    %v119 = vadd.f32 0.0, %v118
    %v120 = vpop.f32.mrb[0].mxu0
    %121 = vmatprep.mubr.f32.mxu0 0.0
    %122 = vmatmul.mubr.f32.gmra.mrb[0].mxu0 %v46
    %v123 = vpop.f32.mrb[0].mxu0
    %v124 = vadd.f32 0.0, %v123
    %v125 = vpop.f32.mrb[0].mxu0
    %126 = vdwg.mxu0
    %v127 = vld [vmem:[%s2] sm:$0xff]
    %v128 = vld [vmem:[%s2 + $0x8] sm:$0xff]
    %v129 = vld [vmem:[%s2 + $0x10] sm:$0xff]
    %v130 = vld [vmem:[%s2 + $0x18] sm:$0xff]
    %v131 = vld [vmem:[%s3] sm:$0x1]
    %v133 = vlaneseq
    %v134 = vshrl.u32 %v133, 7
    %v135 = vsub.s32 0, %v134
    %v136 = vrot.slane %v131, %v135
    %vm138 = vcmask 261120
    %v140 = vsel %vm138, %v119, 0
    %v143 = vsel %vm138, %v124, 0
    %145 = vmatprep.subr.mxu0 0.0
    %146 = vmatpush1.msra.mxu0 %v127
    %147 = vmatprep.subr.mxu0 0.0
    %148 = vmatpush1.msra.mxu0 %v128
    %149 = vmatprep.subr.mxu0 0.0
    %150 = vmatpush1.msra.mxu0 %v129
    %151 = vmatprep.subr.mxu0 0.0
    %152 = vmatpush1.msra.mxu0 %v130
    %153 = vmatprep.subr.mxu0 0.0
    %154 = vmatpush1.msra.mxu0 0.0
    %155 = vmatprep.subr.mxu0 0.0
    %156 = vmatpush1.msra.mxu0 0.0
    %157 = vmatprep.subr.mxu0 0.0
    %158 = vmatpush1.msra.mxu0 0.0
    %159 = vmatprep.subr.mxu0 0.0
    %160 = vmatpush1.msra.mxu0 0.0
    %161 = vmatprep.subr.mxu0 0.0
    %162 = vmatpush1.msra.mxu0 0.0
    %163 = vmatprep.subr.mxu0 0.0
    %164 = vmatpush1.msra.mxu0 0.0
    %165 = vmatprep.subr.mxu0 0.0
    %166 = vmatpush1.msra.mxu0 0.0
    %167 = vmatprep.subr.mxu0 0.0
    %168 = vmatpush1.msra.mxu0 0.0
    %169 = vmatprep.subr.mxu0 0.0
    %170 = vmatpush1.msra.mxu0 0.0
    %171 = vmatprep.subr.mxu0 0.0
    %172 = vmatpush1.msra.mxu0 0.0
    %173 = vmatprep.subr.mxu0 0.0
    %174 = vmatpush1.msra.mxu0 0.0
    %175 = vmatprep.subr.mxu0 0.0
    %176 = vmatpush1.msra.mxu0 0.0
    %177 = vmatprep.subr.mxu0 0.0
    %178 = vmatpush1.msra.mxu0 0.0
    %179 = vmatprep.subr.mxu0 0.0
    %180 = vmatpush1.msra.mxu0 0.0
    %181 = vmatprep.subr.mxu0 0.0
    %182 = vmatpush1.msra.mxu0 0.0
    %183 = vmatprep.subr.mxu0 0.0
    %184 = vmatpush1.msra.mxu0 0.0
    %185 = vmatprep.subr.mxu0 0.0
    %186 = vmatpush1.msra.mxu0 0.0
    %187 = vmatprep.subr.mxu0 0.0
    %188 = vmatpush1.msra.mxu0 0.0
    %189 = vmatprep.subr.mxu0 0.0
    %190 = vmatpush1.msra.mxu0 0.0
    %191 = vmatprep.subr.mxu0 0.0
    %192 = vmatpush1.msra.mxu0 0.0
    %193 = vmatprep.subr.mxu0 0.0
    %194 = vmatpush1.msra.mxu0 0.0
    %195 = vmatprep.subr.mxu0 0.0
    %196 = vmatpush1.msra.mxu0 0.0
    %197 = vmatprep.subr.mxu0 0.0
    %198 = vmatpush1.msra.mxu0 0.0
    %199 = vmatprep.subr.mxu0 0.0
    %200 = vmatpush1.msra.mxu0 0.0
    %201 = vmatprep.subr.mxu0 0.0
    %202 = vmatpush1.msra.mxu0 0.0
    %203 = vmatprep.subr.mxu0 0.0
    %204 = vmatpush1.msra.mxu0 0.0
    %205 = vmatprep.subr.mxu0 0.0
    %206 = vmatpush1.msra.mxu0 0.0
    %207 = vmatprep.subr.mxu0 0.0
    %208 = vmatpush1.msra.mxu0 0.0
    %209 = vmatprep.mubr.f32.mxu0 0.0
    %210 = vmatmul.mubr.f32.gmra.mrb[0].mxu0 %v140
    %v211 = vpop.f32.mrb[0].mxu0
    %v212 = vadd.f32 %v136, %v211
    %v213 = vpop.f32.mrb[0].mxu0
    %214 = vmatprep.mubr.f32.mxu0 0.0
    %215 = vmatmul.mubr.f32.gmra.mrb[0].mxu0 %v143
    %v216 = vpop.f32.mrb[0].mxu0
    %v217 = vadd.f32 %v136, %v216
    %v218 = vpop.f32.mrb[0].mxu0
    %219 = vdwg.mxu0
    %220 = vst [vmem:[#allocation2] sm:$0xff] %v212
    %221 = vst [vmem:[#allocation2 + $0x8] sm:$0xff] %v217
    // Predicated region
    $region18: #{tpu_custom_call.1} parent=1 // pred_check
      _
    $region19: #{tpu_custom_call.1} parent=1 // pred_check_branch
      %223 = sbr.rel (0) target = $region21
    $region20: #{tpu_custom_call.1} parent=1 // pred_region
      %s225 = ssub.s32 256, 256
      %226 = vsyncadd [#allocation3], %s225
      %s227 = sshll.u32 [#allocation2], 4
      %s228 = int_to_ptr.vmem [resolvable:$true] %s227
      %233 = dma.vmem_to_hbm [thread:$0]  %s228, 256, %s4, [#allocation3], 128, 128, 8
    $region21: #{tpu_custom_call.1} parent=1 // pred_fallthru
      _
    // Predicated region
    $region22: #{tpu_custom_call.1} parent=1 // pred_check
      _
    $region23: #{tpu_custom_call.1} parent=1 // pred_check_branch
      %235 = sbr.rel (0) target = $region25
    $region24: #{tpu_custom_call.1} parent=1 // pred_region
      %236 = dma.done [#allocation3], 256
    $region25: #{tpu_custom_call.1} parent=1 // pred_fallthru
      _
    %237 = vsyncpa [#allocation3], 1

</llo_original>
